<compile_context>
chip_gen: v5e
topology: v5e:2x2
jax: 0.10.0
libtpu: 0.0.40
codegen_flags: <defaults>
</compile_context>

<pallas_src>
import functools
import math

import jax
import jax.numpy as jnp
from jax.experimental import pallas as pl
from jax.experimental.pallas import tpu as pltpu


def _timestep_rmsnorm_kernel(x_ref, s_ref, o_ref, *, eps, inv_sqrt_w, group_w, fold):
    # x_ref: (1, tC, tH, L) block in native NCHW storage order (L = fold * W).
    # s_ref: (tC, 1) per-channel scale column.
    _, tc, th, lanes = x_ref.shape
    scale = s_ref[...].astype(jnp.float32)                       # (tC, 1)

    if fold > 1:
        m = tc * th
        xf = x_ref[...].astype(jnp.float32).reshape(m, lanes)    # leading-dim collapse: free
        x2 = xf * xf

        # 0/1 segment-selection matrices: lane i belongs to group i // group_w.
        lane_i = jax.lax.broadcasted_iota(jnp.int32, (lanes, fold), 0)
        grp_lo = jax.lax.broadcasted_iota(jnp.int32, (lanes, fold), 1) * group_w
        g = jnp.where((lane_i >= grp_lo) & (lane_i < grp_lo + group_w), 1.0, 0.0)
        lane_i_t = jax.lax.broadcasted_iota(jnp.int32, (fold, lanes), 1)
        grp_lo_t = jax.lax.broadcasted_iota(jnp.int32, (fold, lanes), 0) * group_w
        gt = jnp.where((lane_i_t >= grp_lo_t) & (lane_i_t < grp_lo_t + group_w), 1.0, 0.0)

        # Per-group (= per original W-row) sum of squares on the idle MXU.
        ssq = jnp.dot(x2, g, preferred_element_type=jnp.float32)          # (m, fold)
        denom = jnp.sqrt(ssq).reshape(tc, th, fold) * inv_sqrt_w + eps
        # Divide only on the W-reduced tensor (1/W of the block).
        mult = (scale.reshape(tc, 1, 1) / denom).reshape(m, fold)
        # Broadcast each group's multiplier back across its W lanes (exactly one
        # nonzero per column of gt), again on the MXU -> big block stays lane-dense.
        mult_full = jnp.dot(mult, gt, preferred_element_type=jnp.float32)
        mult_full = mult_full.reshape(1, tc, th, lanes)
        # Final multiply in the input dtype: no long-lived f32 copy of the block.
        o_ref[...] = (x_ref[...] * mult_full.astype(o_ref.dtype)).astype(o_ref.dtype)
    else:
        xf = x_ref[...].astype(jnp.float32)                      # (1, tC, tH, W)
        ssq = jnp.sum(xf * xf, axis=-1, keepdims=True)           # (1, tC, tH, 1)
        denom = jnp.sqrt(ssq) * inv_sqrt_w + eps
        mult = scale.reshape(1, tc, 1, 1) / denom                # small divide
        o_ref[...] = (x_ref[...] * mult.astype(o_ref.dtype)).astype(o_ref.dtype)


def _pick_tiles(C, Hg, L, itemsize, target_bytes):
    """Pick (tC, tHg): whole channels (contiguous DMA) first, tile Hg only if needed.

    tC is kept equal to C or a multiple of 8 so the (tC, 1) scale block always
    satisfies the sublane tiling rule; the lane axis L always stays full.
    """
    sub = max(8, 32 // itemsize)            # sublane quantum for this dtype
    chan_bytes = Hg * L * itemsize          # one full channel = one contiguous HBM run
    if C * chan_bytes <= target_bytes:
        return C, Hg
    max_tc = target_bytes // chan_bytes
    if max_tc >= 8:
        return min(C, (max_tc // 8) * 8), Hg
    # A handful of channels already exceeds the budget: tile Hg instead.
    tC = min(C, 8)
    max_th = max(1, target_bytes // (tC * L * itemsize))
    if max_th >= Hg:
        tHg = Hg
    elif max_th >= sub:
        tHg = (max_th // sub) * sub
    else:
        tHg = min(Hg, sub)
    return tC, tHg


def _maybe_split_for_megacore(B, C, Hg, tC, tHg, sub):
    """Ensure >= 2 parallel blocks so a 2-TC chip (v7x) gets balanced work."""
    if B * pl.cdiv(C, tC) * pl.cdiv(Hg, tHg) >= 2:
        return tC, tHg
    if tC == C and C >= 16:
        return max(8, ((C // 2) // 8) * 8), tHg
    if tHg == Hg and Hg >= 2 * sub:
        return tC, max(sub, ((Hg // 2) // sub) * sub)
    return tC, tHg


def timestep_rmsnorm(x_nchw, t_vec, w_lin, eps=1e-8, target_block_bytes=1 << 20):
    """x_nchw: (B, C, H, W); t_vec: (T,); w_lin: (C, T) as in nn.Linear(T, C, bias=False)."""
    B, C, H, W = x_nchw.shape
    D, T = w_lin.shape
    assert D == C, "Linear output dim must match channel dim C"

    # Hoisted Linear(t): one tiny XLA dot; (C, 1) column for cheap per-channel blocks.
    scale = (w_lin.astype(jnp.float32) @ t_vec.astype(jnp.float32)).reshape(C, 1)

    # Lane folding: make the minor dim a multiple of 128 when W is small.
    fold = 1
    if W < 128:
        k0 = 128 // math.gcd(W, 128)
        if H % k0 == 0:
            fold = k0
    Hg, L = H // fold, fold * W
    xr = x_nchw.reshape(B, C, Hg, L)          # free: H and W are adjacent in NCHW

    itemsize = jnp.dtype(x_nchw.dtype).itemsize
    sub = max(8, 32 // itemsize)
    tC, tHg = _pick_tiles(C, Hg, L, itemsize, target_block_bytes)
    tC, tHg = _maybe_split_for_megacore(B, C, Hg, tC, tHg, sub)

    grid = (B, pl.cdiv(C, tC), pl.cdiv(Hg, tHg))

    kernel = functools.partial(
        _timestep_rmsnorm_kernel,
        eps=float(eps),
        inv_sqrt_w=float(1.0 / math.sqrt(W)),
        group_w=W,
        fold=fold,
    )

    out = pl.pallas_call(
        kernel,
        out_shape=jax.ShapeDtypeStruct((B, C, Hg, L), x_nchw.dtype),
        grid=grid,
        in_specs=[
            pl.BlockSpec((1, tC, tHg, L), lambda b, c, h: (b, c, h, 0)),
            pl.BlockSpec((tC, 1), lambda b, c, h: (c, 0)),
        ],
        out_specs=pl.BlockSpec((1, tC, tHg, L), lambda b, c, h: (b, c, h, 0)),
        compiler_params=pltpu.CompilerParams(
            dimension_semantics=("parallel", "parallel", "parallel")
        ),
    )(xr, scale)
    return out.reshape(B, C, H, W)


def _reference(x_nchw, t_vec, w_lin, eps=1e-8):
    # Pure-JAX reference matching the PyTorch forward exactly.
    scale = w_lin @ t_vec                                        # (C,)
    norm = jnp.sqrt(jnp.sum(x_nchw * x_nchw, axis=-1, keepdims=True))
    rms = norm / (x_nchw.shape[-1] ** 0.5)
    return scale[None, :, None, None] * x_nchw / (rms + eps)


if __name__ == "__main__":
    # TODO(synk): the PyTorch forward wraps the result in torch.compile(tensor); that
    # wrapper has no numerical effect, so only the rmsnorm math is reproduced here.
    B, C, H, W = 2, 4, 16, 16
    T = 8
    eps = 1e-8

    key = jax.random.PRNGKey(0)
    kx, kt, kw = jax.random.split(key, 3)
    x = jax.random.normal(kx, (B, C, H, W), dtype=jnp.float32)
    t = jax.random.normal(kt, (T,), dtype=jnp.float32)
    # nn.Linear(T, C, bias=False).weight has shape (C, T); deterministic init.
    w = jax.random.normal(kw, (C, T), dtype=jnp.float32) * 0.1

    out = jax.block_until_ready(timestep_rmsnorm(x, t, w, eps=eps))

    ref = _reference(x, t, w, eps=eps)
    assert out.shape == (B, C, H, W)
    # The segment-sum / broadcast matmuls run on the MXU, whose f32 path is a
    # multi-pass bf16 decomposition with f32 accumulation; allow 1e-4 relative
    # slack vs the exact-f32 VPU reference (typical error is ~1e-6).
    assert jnp.allclose(out, ref, rtol=1e-4, atol=1e-5), "mismatch vs reference"

    print("KERNEL_OK")
</pallas_src>

<mosaic_0001>
module attributes {stable_mosaic.version = 11 : i64} {
  func.func @_timestep_rmsnorm_kernel(%arg0: i32, %arg1: i32, %arg2: i32, %arg3: memref<1x4x2x128xf32, #tpu.memory_space<vmem>>, %arg4: memref<4x1xf32, #tpu.memory_space<vmem>>, %arg5: memref<1x4x2x128xf32, #tpu.memory_space<vmem>>) attributes {dimension_semantics = [#tpu.dimension_semantics<parallel>, #tpu.dimension_semantics<parallel>, #tpu.dimension_semantics<parallel>], iteration_bounds = array<i64: 2, 1, 1>, scalar_prefetch = 0 : i64, scratch_operands = 0 : i64, tpu.core_type = #tpu.core_type<tc>, window_params = [{transform_indices = @transform_0, window_bounds = array<i64: 1, 4, 2, 128>}, {transform_indices = @transform_1, window_bounds = array<i64: 4, 1>}, {transform_indices = @transform_2, window_bounds = array<i64: 1, 4, 2, 128>}]} {
    %c0 = arith.constant 0 : index
    %c0_0 = arith.constant 0 : index
    %0 = vector.load %arg4[%c0, %c0_0] : memref<4x1xf32, #tpu.memory_space<vmem>>, vector<4x1xf32>
    %c0_1 = arith.constant 0 : index
    %c0_2 = arith.constant 0 : index
    %c0_3 = arith.constant 0 : index
    %c0_4 = arith.constant 0 : index
    %1 = vector.load %arg3[%c0_1, %c0_2, %c0_3, %c0_4] : memref<1x4x2x128xf32, #tpu.memory_space<vmem>>, vector<1x4x2x128xf32>
    %2 = vector.shape_cast %1 : vector<1x4x2x128xf32> to vector<8x128xf32>
    %3 = arith.mulf %2, %2 : vector<8x128xf32>
    %4 = tpu.iota {dimensions = array<i32: 0>} : vector<128x8xi32>
    %5 = tpu.iota {dimensions = array<i32: 1>} : vector<128x8xi32>
    %c16_i32 = arith.constant 16 : i32
    %6 = vector.broadcast %c16_i32 : i32 to vector<128x8xi32>
    %7 = arith.muli %5, %6 : vector<128x8xi32>
    %8 = arith.cmpi sge, %4, %7 : vector<128x8xi32>
    %c16_i32_5 = arith.constant 16 : i32
    %9 = vector.broadcast %c16_i32_5 : i32 to vector<128x8xi32>
    %10 = arith.addi %7, %9 : vector<128x8xi32>
    %11 = arith.cmpi slt, %4, %10 : vector<128x8xi32>
    %12 = arith.andi %8, %11 : vector<128x8xi1>
    %cst = arith.constant 1.000000e+00 : f32
    %cst_6 = arith.constant 0.000000e+00 : f32
    %13 = vector.broadcast %cst : f32 to vector<128x8xf32>
    %14 = vector.broadcast %cst_6 : f32 to vector<128x8xf32>
    %15 = arith.select %12, %13, %14 : vector<128x8xi1>, vector<128x8xf32>
    %16 = tpu.iota {dimensions = array<i32: 1>} : vector<8x128xi32>
    %17 = tpu.iota {dimensions = array<i32: 0>} : vector<8x128xi32>
    %c16_i32_7 = arith.constant 16 : i32
    %18 = vector.broadcast %c16_i32_7 : i32 to vector<8x128xi32>
    %19 = arith.muli %17, %18 : vector<8x128xi32>
    %20 = arith.cmpi sge, %16, %19 : vector<8x128xi32>
    %c16_i32_8 = arith.constant 16 : i32
    %21 = vector.broadcast %c16_i32_8 : i32 to vector<8x128xi32>
    %22 = arith.addi %19, %21 : vector<8x128xi32>
    %23 = arith.cmpi slt, %16, %22 : vector<8x128xi32>
    %24 = arith.andi %20, %23 : vector<8x128xi1>
    %cst_9 = arith.constant 1.000000e+00 : f32
    %cst_10 = arith.constant 0.000000e+00 : f32
    %25 = vector.broadcast %cst_9 : f32 to vector<8x128xf32>
    %26 = vector.broadcast %cst_10 : f32 to vector<8x128xf32>
    %27 = arith.select %24, %25, %26 : vector<8x128xi1>, vector<8x128xf32>
    %cst_11 = arith.constant dense<0.000000e+00> : vector<8x8xf32>
    %28 = tpu.matmul %3, %15, %cst_11 {dimension_numbers = #tpu.dot_dimension_numbers<[1], [0], [0], [1], [0, 0, 1, 1], [], []>} : vector<8x128xf32>, vector<128x8xf32>, vector<8x8xf32> -> vector<8x8xf32>
    %29 = math.sqrt %28 : vector<8x8xf32>
    %30 = vector.shape_cast %29 : vector<8x8xf32> to vector<4x2x8xf32>
    %cst_12 = arith.constant 2.500000e-01 : f32
    %31 = vector.broadcast %cst_12 : f32 to vector<4x2x8xf32>
    %32 = arith.mulf %30, %31 : vector<4x2x8xf32>
    %cst_13 = arith.constant 9.99999993E-9 : f32
    %33 = vector.broadcast %cst_13 : f32 to vector<4x2x8xf32>
    %34 = arith.addf %32, %33 : vector<4x2x8xf32>
    %35 = vector.shape_cast %0 : vector<4x1xf32> to vector<4x1x1xf32>
    %36 = vector.broadcast %35 : vector<4x1x1xf32> to vector<4x2x8xf32>
    %37 = arith.divf %36, %34 : vector<4x2x8xf32>
    %38 = vector.shape_cast %37 : vector<4x2x8xf32> to vector<8x8xf32>
    %cst_14 = arith.constant dense<0.000000e+00> : vector<8x128xf32>
    %39 = tpu.matmul %38, %27, %cst_14 {dimension_numbers = #tpu.dot_dimension_numbers<[1], [0], [0], [1], [0, 0, 1, 1], [], []>} : vector<8x8xf32>, vector<8x128xf32>, vector<8x128xf32> -> vector<8x128xf32>
    %40 = vector.shape_cast %39 : vector<8x128xf32> to vector<1x4x2x128xf32>
    %c0_15 = arith.constant 0 : index
    %c0_16 = arith.constant 0 : index
    %c0_17 = arith.constant 0 : index
    %c0_18 = arith.constant 0 : index
    %41 = vector.load %arg3[%c0_15, %c0_16, %c0_17, %c0_18] : memref<1x4x2x128xf32, #tpu.memory_space<vmem>>, vector<1x4x2x128xf32>
    %42 = arith.mulf %41, %40 : vector<1x4x2x128xf32>
    %c0_19 = arith.constant 0 : index
    %c0_20 = arith.constant 0 : index
    %c0_21 = arith.constant 0 : index
    %c0_22 = arith.constant 0 : index
    %43 = vector.load %arg5[%c0_19, %c0_20, %c0_21, %c0_22] : memref<1x4x2x128xf32, #tpu.memory_space<vmem>>, vector<1x4x2x128xf32>
    tpu.vector_store %arg5[%c0_19, %c0_20, %c0_21, %c0_22], %42 {strides = array<i32>} : memref<1x4x2x128xf32, #tpu.memory_space<vmem>>, vector<1x4x2x128xf32>,
    return
  }
  func.func @transform_0(%arg0: i32, %arg1: i32, %arg2: i32) -> (i32, i32, i32, i32) {
    %c0_i32 = arith.constant 0 : i32
    %c0_i32_0 = arith.constant 0 : i32
    return %arg0, %arg1, %arg2, %c0_i32 : i32, i32, i32, i32
  }
  func.func @transform_1(%arg0: i32, %arg1: i32, %arg2: i32) -> (i32, i32) {
    %c0_i32 = arith.constant 0 : i32
    %c0_i32_0 = arith.constant 0 : i32
    return %arg1, %c0_i32 : i32, i32
  }
  func.func @transform_2(%arg0: i32, %arg1: i32, %arg2: i32) -> (i32, i32, i32, i32) {
    %c0_i32 = arith.constant 0 : i32
    %c0_i32_0 = arith.constant 0 : i32
    return %arg0, %arg1, %arg2, %c0_i32 : i32, i32, i32, i32
  }
}

</mosaic_0001>

<llo_original>
// kernel: tpu_custom_call.1
$region0: #{tpu_custom_call.1}
  #allocation0 [shape = 'u32[]', space=smem, size = 0x4, offset = 0x4, fixed_abs, tag = 'smem constant byte address 0x4 - core index']
  #allocation1 [shape = 'u32[72,128]{1,0:T(1,128)}', space=vmem, size = 0x9000, scoped, tag = 'internal scratch']
  %s0 = inlined_call_operand.hbm [shape: f32[2,4,2,128], index: 0, kind: input, shape index: {}]
  %s1 = inlined_call_operand.vmem [shape: f32[4,1], index: 1, kind: input, shape index: {}]
  %s2 = inlined_call_operand.hbm [shape: f32[2,4,2,128], index: 2, kind: output, shape index: {}]
  %s3 = sld [smem:[#allocation0]]
  $region45: #{tpu_custom_call.1} parent=0
    _
  %s5 = ssub.s32 1, %s3
  %s6 = scalar_select 0, %s5, %s3
  $region1: #{tpu_custom_call.1} parent=0
    #allocation2 [shape = 'u8[8192]{0}', space=vmem, size = 0x2000, scoped, tag = 'input window, operand 0']
    #allocation3 [shape = 's32[2]{0}', space=sflag, size = 0x8, scoped, tag = 'scoped memory for tpu_custom_call.1']
    #allocation4 [shape = 's32[2]{0}', space=sflag, size = 0x8, scoped, tag = 'scoped memory for tpu_custom_call.1']
    #allocation5 [shape = 'u8[8192]{0}', space=vmem, size = 0x2000, scoped, tag = 'output window, operand 0']
    %7 = vsyncpa [#allocation3], 0
    %s8 = scalar_lea.sflag [#allocation3], 1
    %9 = vsyncpa %s8, 0
    %10 = vsyncpa [#allocation4], 0
    %s11 = scalar_lea.sflag [#allocation4], 1
    %12 = vsyncpa %s11, 0
    loop: start=0, step=1, limit=4
    $region2: #{tpu_custom_call.1} parent=1 // loop_pre_header
      _
    $region3: #{tpu_custom_call.1} parent=1 // loop_header
      %s14 = sphi 0, %s18
      %p15 = scmp.ge.s32.totalorder %s14, 4
      %s21 = sphi 0, %s40
      %s22 = sphi 0, %s36
      %s23 = sphi 0, %s32
      %s24 = sphi 0, %s21
      %s25 = sphi 0, %s22
      %s26 = sphi 0, %s23
      %s27 = sphi 0, %s24
      %s28 = sphi 0, %s25
      %s29 = sphi 0, %s26
      %s47 = sphi 0, %s49
      %s50 = sphi 0, %s47
      %s51 = sphi 0, %s50
      %s67 = sphi 0, %s51
      %s73 = sphi 0, %s75
      %s76 = sphi 0, %s73
      %s77 = sphi 0, %s76
      %s93 = sphi 0, %s77
      %s103 = sphi 0, %s105
      %s106 = sphi 0, %s103
      %s107 = sphi 0, %s106
      %s123 = sphi 0, %s107
    $region4: #{tpu_custom_call.1} parent=1 // loop_header_branch
      %17 = sbr.rel (%p15) target = $region8
    $region5: #{tpu_custom_call.1} parent=1 // loop_body
      %s19 = ssub.s32 %s14, 1
      %s20 = ssub.s32 %s14, 2
      %s30 = sadd.s32 1, %s23
      %p31 = scmp.ge.s32.totalorder %s30, 1
      %s32 = scalar_select %p31, 0, %s30
      %s33 = sadd.s32 1, %s22
      %s34 = scalar_select %p31, %s33, %s22
      %p35 = scmp.ge.s32.totalorder %s34, 1
      %s36 = scalar_select %p35, 0, %s34
      %s37 = sadd.s32 1, %s21
      %s38 = scalar_select %p35, %s37, %s21
      %p39 = scmp.ge.s32.totalorder %s38, 2
      %s40 = scalar_select %p39, 0, %s38
      %s41 = ssub.s32 %s21, %s40
      %s42 = ssub.s32 %s22, %s36
      %s43 = sor.u32 %s41, %s42
      %s44 = ssub.s32 %s23, %s32
      %s45 = sor.u32 %s43, %s44
      %p46 = scmp.eq.s32.totalorder %s45, 0
      %s48 = sadd.s32 %s47, 1
      %s49 = scalar_select %p46, %s47, %s48
      %p52 = pneg %p46
      %p53 = scmp.eq.s32.totalorder %s14, 1
      %p54 = por %p52, %p53
      %p55 = scmp.ne.s32.totalorder %s47, %s50
      %p56 = scmp.eq.s32.totalorder %s14, 0
      %p57 = por %p55, %p56
      %p58 = scmp.ne.s32.totalorder %s47, %s50
      %p59 = scmp.eq.s32.totalorder %s19, 1
      %p60 = por %p58, %p59
      %p61 = scmp.ne.s32.totalorder %s50, %s51
      %p62 = scmp.eq.s32.totalorder %s19, 0
      %p63 = por %p61, %p62
      %p64 = scmp.ne.s32.totalorder %s50, %s51
      %p65 = scmp.eq.s32.totalorder %s20, 1
      %p66 = por %p64, %p65
      %p68 = scmp.ne.s32.totalorder %s51, %s67
      %p69 = scmp.eq.s32.totalorder %s20, 0
      %p70 = por %p68, %p69
      %s71 = ssub.s32 %s22, %s36
      %p72 = scmp.eq.s32.totalorder %s71, 0
      %s74 = sadd.s32 %s73, 1
      %s75 = scalar_select %p72, %s73, %s74
      %p78 = pneg %p72
      %p79 = scmp.eq.s32.totalorder %s14, 1
      %p80 = por %p78, %p79
      %p81 = scmp.ne.s32.totalorder %s73, %s76
      %p82 = scmp.eq.s32.totalorder %s14, 0
      %p83 = por %p81, %p82
      %p84 = scmp.ne.s32.totalorder %s73, %s76
      %p85 = scmp.eq.s32.totalorder %s19, 1
      %p86 = por %p84, %p85
      %p87 = scmp.ne.s32.totalorder %s76, %s77
      %p88 = scmp.eq.s32.totalorder %s19, 0
      %p89 = por %p87, %p88
      %p90 = scmp.ne.s32.totalorder %s76, %s77
      %p91 = scmp.eq.s32.totalorder %s20, 1
      %p92 = por %p90, %p91
      %p94 = scmp.ne.s32.totalorder %s77, %s93
      %p95 = scmp.eq.s32.totalorder %s20, 0
      %p96 = por %p94, %p95
      %s97 = ssub.s32 %s21, %s40
      %s98 = ssub.s32 %s22, %s36
      %s99 = sor.u32 %s97, %s98
      %s100 = ssub.s32 %s23, %s32
      %s101 = sor.u32 %s99, %s100
      %p102 = scmp.eq.s32.totalorder %s101, 0
      %s104 = sadd.s32 %s103, 1
      %s105 = scalar_select %p102, %s103, %s104
      %p108 = pneg %p102
      %p109 = scmp.eq.s32.totalorder %s14, 1
      %p110 = por %p108, %p109
      %p111 = scmp.ne.s32.totalorder %s103, %s106
      %p112 = scmp.eq.s32.totalorder %s14, 0
      %p113 = por %p111, %p112
      %p114 = scmp.ne.s32.totalorder %s103, %s106
      %p115 = scmp.eq.s32.totalorder %s19, 1
      %p116 = por %p114, %p115
      %p117 = scmp.ne.s32.totalorder %s106, %s107
      %p118 = scmp.eq.s32.totalorder %s19, 0
      %p119 = por %p117, %p118
      %p120 = scmp.ne.s32.totalorder %s106, %s107
      %p121 = scmp.eq.s32.totalorder %s20, 1
      %p122 = por %p120, %p121
      %p124 = scmp.ne.s32.totalorder %s107, %s123
      %p125 = scmp.eq.s32.totalorder %s20, 0
      %p126 = por %p124, %p125
      %p127 = scmp.le.s32.totalorder 1, %s14
      %p128 = scmp.lt.s32.totalorder %s14, 3
      %p129 = pnand %p127, %p128
      %p130 = pneg %p129
      // Predicated region
      $region9: #{tpu_custom_call.1} parent=5 // pred_check
        _
      $region10: #{tpu_custom_call.1} parent=5 // pred_check_branch
        %132 = sbr.rel (%p129) target = $region12
      $region11: #{tpu_custom_call.1} parent=5 // pred_region
        %s133 = ssub.s32 %s14, 1
        // Predicated region
        $region13: #{tpu_custom_call.1} parent=11 // pred_check
          %p134 = pneg %p89
        $region14: #{tpu_custom_call.1} parent=11 // pred_check_branch
          %136 = sbr.rel (%p134) target = $region16
        $region15: #{tpu_custom_call.1} parent=11 // pred_region
          %p137 = scmp.lt.s32.totalorder %s25, 0
          %s138 = scalar_select %p137, %s25, 0
          %s139 = smul.addr %s138, 4
          %s140 = scalar_lea.vmem %s1, %s139
        $region16: #{tpu_custom_call.1} parent=11 // pred_fallthru
          _
      $region12: #{tpu_custom_call.1} parent=5 // pred_fallthru
        _
      %p141 = scmp.lt.s32.totalorder %s14, 2
      // Predicated region
      $region17: #{tpu_custom_call.1} parent=5 // pred_check
        %p142 = pneg %p141
      $region18: #{tpu_custom_call.1} parent=5 // pred_check_branch
        %144 = sbr.rel (%p142) target = $region20
      $region19: #{tpu_custom_call.1} parent=5 // pred_region
        // Predicated region
        $region21: #{tpu_custom_call.1} parent=19 // pred_check
          %p145 = pneg %p57
        $region22: #{tpu_custom_call.1} parent=19 // pred_check_branch
          %147 = sbr.rel (%p145) target = $region24
        $region23: #{tpu_custom_call.1} parent=19 // pred_region
          %s148 = sand.u32 %s47, 1
          %s149 = scalar_lea.sflag [#allocation3], %s148
          %s150 = sand.u32 %s47, 1
          %s151 = smul.addr %s150, 8
          %s152 = scalar_lea.vmem [#allocation2], %s151
          %s153 = smul.u32 4, %s22
          %155 = vsyncadd %s149, 0
          %s156 = sadd.s32 %s23, %s153
          %s157 = smul.addr %s21, 4
          %s158 = sadd.s32 %s156, %s157
          %s159 = smul.addr %s158, 2
          %s160 = scalar_lea.hbm %s0, %s159
          %s161 = sshll.u32 %s160, 4
          %s162 = int_to_ptr.hbm [resolvable:$true] %s161
          %s163 = sshll.u32 %s152, 4
          %s164 = int_to_ptr.vmem [resolvable:$true] %s163
          %169 = dma.hbm_to_vmem [thread:$0]  %s162, 128, %s164, %s149, 32, 32, 2
        $region24: #{tpu_custom_call.1} parent=19 // pred_fallthru
          _
      $region20: #{tpu_custom_call.1} parent=5 // pred_fallthru
        _
      %p170 = scmp.le.s32.totalorder 1, %s14
      %p171 = scmp.lt.s32.totalorder %s14, 3
      %p172 = pnand %p170, %p171
      %p173 = pneg %p172
      // Predicated region
      $region25: #{tpu_custom_call.1} parent=5 // pred_check
        _
      $region26: #{tpu_custom_call.1} parent=5 // pred_check_branch
        %175 = sbr.rel (%p172) target = $region28
      $region27: #{tpu_custom_call.1} parent=5 // pred_region
        %s176 = ssub.s32 %s14, 1
        %s177 = sand.u32 %s50, 1
        %s178 = scalar_lea.sflag [#allocation3], %s177
        %s179 = sand.u32 %s50, 1
        %s180 = smul.addr %s179, 8
        %s181 = scalar_lea.vmem [#allocation2], %s180
        // Predicated region
        $region29: #{tpu_custom_call.1} parent=27 // pred_check
          %p182 = pneg %p63
        $region30: #{tpu_custom_call.1} parent=27 // pred_check_branch
          %184 = sbr.rel (%p182) target = $region32
        $region31: #{tpu_custom_call.1} parent=27 // pred_region
          %186 = dma.done %s178, 128
        $region32: #{tpu_custom_call.1} parent=27 // pred_fallthru
          _
        %s187 = sand.u32 %s50, 1
        %s188 = scalar_lea.sflag [#allocation3], %s187
        %s189 = sand.u32 %s50, 1
        %s190 = smul.addr %s189, 8
        %s191 = scalar_lea.vmem [#allocation2], %s190
        %p192 = pneg %p63
        %p193 = pneg %p60
        %p194 = scmp.lt.s32.totalorder %s25, 0
        %s195 = scalar_select %p194, %s25, 0
        %s196 = smul.addr %s195, 4
        %s197 = scalar_lea.vmem %s1, %s196
        %p198 = pneg %p89
        %p199 = pneg %p86
        %p200 = pneg %p119
        %p201 = pneg %p116
        %s202 = sand.u32 %s106, 1
        %s203 = scalar_lea.sflag [#allocation4], %s202
        %s204 = sand.u32 %s106, 1
        %s205 = smul.addr %s204, 8
        %s206 = scalar_lea.vmem [#allocation5], %s205
        %s207 = smul.u32 4, %s25
        %p208 = scmp.lt.s32.totalorder %s25, 0
        %s209 = scalar_select %p208, %s25, 0
        %s210 = smul.addr %s209, 4
        %s211 = scalar_lea.vmem %s1, %s210
        %s212 = smul.u32 4, %s25
        %v213 = vld [vmem:[%s211] sm:$0xf]
        %v214 = vld [vmem:[%s181] sm:$0x3]
        %v215 = vld [vmem:[%s181 + $0x2] sm:$0x3]
        %v216 = vld [vmem:[%s181 + $0x4] sm:$0x3]
        %v217 = vld [vmem:[%s181 + $0x6] sm:$0x3]
        %v218 = vmul.f32 %v214, %v214
        %v219 = vmul.f32 %v215, %v215
        %v220 = vmul.f32 %v216, %v216
        %v221 = vmul.f32 %v217, %v217
        %v222 = vlaneseq
        %v223 = vshrl.u32 %v222, 7
        %v224 = vadd.s32 %v223, 8
        %v225 = vadd.s32 %v223, 16
        %v226 = vadd.s32 %v223, 24
        %v227 = vadd.s32 %v223, 32
        %v228 = vadd.s32 %v223, 40
        %v229 = vadd.s32 %v223, 48
        %v230 = vadd.s32 %v223, 56
        %v231 = vadd.s32 %v223, 64
        %v232 = vadd.s32 %v223, 72
        %v233 = vadd.s32 %v223, 80
        %v234 = vadd.s32 %v223, 88
        %v235 = vadd.s32 %v223, 96
        %v236 = vadd.s32 %v223, 104
        %v237 = vadd.s32 %v223, 112
        %v238 = vadd.s32 %v223, 120
        %v239 = vlaneseq
        %v240 = vand.u32 %v239, 127
        %v241 = vmul.u32 %v240, 16
        %vm242 = vcmp.ge.s32.totalorder %v223, %v241
        %vm243 = vcmp.ge.s32.totalorder %v224, %v241
        %vm244 = vcmp.ge.s32.totalorder %v225, %v241
        %vm245 = vcmp.ge.s32.totalorder %v226, %v241
        %vm246 = vcmp.ge.s32.totalorder %v227, %v241
        %vm247 = vcmp.ge.s32.totalorder %v228, %v241
        %vm248 = vcmp.ge.s32.totalorder %v229, %v241
        %vm249 = vcmp.ge.s32.totalorder %v230, %v241
        %vm250 = vcmp.ge.s32.totalorder %v231, %v241
        %vm251 = vcmp.ge.s32.totalorder %v232, %v241
        %vm252 = vcmp.ge.s32.totalorder %v233, %v241
        %vm253 = vcmp.ge.s32.totalorder %v234, %v241
        %vm254 = vcmp.ge.s32.totalorder %v235, %v241
        %vm255 = vcmp.ge.s32.totalorder %v236, %v241
        %vm256 = vcmp.ge.s32.totalorder %v237, %v241
        %vm257 = vcmp.ge.s32.totalorder %v238, %v241
        %v258 = vadd.s32 %v241, 16
        %vm259 = vcmp.lt.s32.totalorder %v223, %v258
        %vm260 = vcmp.lt.s32.totalorder %v224, %v258
        %vm261 = vcmp.lt.s32.totalorder %v225, %v258
        %vm262 = vcmp.lt.s32.totalorder %v226, %v258
        %vm263 = vcmp.lt.s32.totalorder %v227, %v258
        %vm264 = vcmp.lt.s32.totalorder %v228, %v258
        %vm265 = vcmp.lt.s32.totalorder %v229, %v258
        %vm266 = vcmp.lt.s32.totalorder %v230, %v258
        %vm267 = vcmp.lt.s32.totalorder %v231, %v258
        %vm268 = vcmp.lt.s32.totalorder %v232, %v258
        %vm269 = vcmp.lt.s32.totalorder %v233, %v258
        %vm270 = vcmp.lt.s32.totalorder %v234, %v258
        %vm271 = vcmp.lt.s32.totalorder %v235, %v258
        %vm272 = vcmp.lt.s32.totalorder %v236, %v258
        %vm273 = vcmp.lt.s32.totalorder %v237, %v258
        %vm274 = vcmp.lt.s32.totalorder %v238, %v258
        %vm275 = vmand %vm242, %vm259
        %vm276 = vmand %vm243, %vm260
        %vm277 = vmand %vm244, %vm261
        %vm278 = vmand %vm245, %vm262
        %vm279 = vmand %vm246, %vm263
        %vm280 = vmand %vm247, %vm264
        %vm281 = vmand %vm248, %vm265
        %vm282 = vmand %vm249, %vm266
        %vm283 = vmand %vm250, %vm267
        %vm284 = vmand %vm251, %vm268
        %vm285 = vmand %vm252, %vm269
        %vm286 = vmand %vm253, %vm270
        %vm287 = vmand %vm254, %vm271
        %vm288 = vmand %vm255, %vm272
        %vm289 = vmand %vm256, %vm273
        %vm290 = vmand %vm257, %vm274
        %v291 = vsel %vm275, 1.0, 0.0
        %v292 = vsel %vm276, 1.0, 0.0
        %v293 = vsel %vm277, 1.0, 0.0
        %v294 = vsel %vm278, 1.0, 0.0
        %v295 = vsel %vm279, 1.0, 0.0
        %v296 = vsel %vm280, 1.0, 0.0
        %v297 = vsel %vm281, 1.0, 0.0
        %v298 = vsel %vm282, 1.0, 0.0
        %v299 = vsel %vm283, 1.0, 0.0
        %v300 = vsel %vm284, 1.0, 0.0
        %v301 = vsel %vm285, 1.0, 0.0
        %v302 = vsel %vm286, 1.0, 0.0
        %v303 = vsel %vm287, 1.0, 0.0
        %v304 = vsel %vm288, 1.0, 0.0
        %v305 = vsel %vm289, 1.0, 0.0
        %v306 = vsel %vm290, 1.0, 0.0
        %v307 = vmul.u32 %v223, 16
        %vm308 = vcmp.ge.s32.totalorder %v240, %v307
        %v309 = vadd.s32 %v307, 16
        %vm310 = vcmp.lt.s32.totalorder %v240, %v309
        %vm311 = vmand %vm308, %vm310
        %v312 = vsel %vm311, 1.0, 0.0
        %317 = vst [vmem:[#allocation1] ss:$4 sm:$0xff] %v218
        %s318 = scalar_lea.vmem [#allocation1], 1
        %319 = vst [vmem:[%s318] ss:$4 sm:$0xff] %v219
        %s320 = scalar_lea.vmem [#allocation1], 2
        %321 = vst [vmem:[%s320] ss:$4 sm:$0xff] %v220
        %s322 = scalar_lea.vmem [#allocation1], 3
        %323 = vst [vmem:[%s322] ss:$4 sm:$0xff] %v221
        %v324 = vld.sshfl [vmem:[#allocation1] sm:$0xff pattern:$0x73625140]
        %326 = vmatpush.msra.mxu0 %v306
        %327 = vmatpush.msra.mxu0 %v305
        %328 = vmatpush.msra.mxu0 %v304
        %329 = vmatpush.msra.mxu0 %v303
        %330 = vmatpush.msra.mxu0 %v302
        %331 = vmatpush.msra.mxu0 %v301
        %332 = vmatpush.msra.mxu0 %v300
        %333 = vmatpush.msra.mxu0 %v299
        %334 = vmatpush.msra.mxu0 %v298
        %335 = vmatpush.msra.mxu0 %v297
        %336 = vmatpush.msra.mxu0 %v296
        %337 = vmatpush.msra.mxu0 %v295
        %338 = vmatpush.msra.mxu0 %v294
        %339 = vmatpush.msra.mxu0 %v293
        %340 = vmatpush.msra.mxu0 %v292
        %341 = vmatpush.msra.mxu0 %v291
        %342 = vmatmul.f32.gmra.mxu0 %v324
        %v343 = vpop.f32.mrf.mxu0
        %v344 = vadd.f32 0.0, %v343
        %345 = vdwg.mxu0
        %v346 = vrsqrt.pop %v344
        %v347 = vmul.f32 %v346, %v344
        %v348 = vmul.f32 %v347, %v346
        %v349 = vmul.f32 0.5, %v348
        %v350 = vsub.f32 1.5, %v349
        %v351 = vmul.f32 %v346, %v350
        %v352 = vmul.f32 %v344, %v351
        %vm353 = vcmp.eq.f32.partialorder %v344, inf
        %v354 = vsel %vm353, %v344, %v352
        %vm355 = vcmp.eq.f32.partialorder %v344, 0.0
        %v356 = vand.u32 %v344, 2147483648
        %v357 = vsel %vm355, %v356, %v354
        %v359 = vrot.slane %v357, 2
        %v360 = vrot.slane %v357, 4
        %v361 = vrot.slane %v357, 6
        %v365 = vmul.f32 %v357, 0.25
        %v366 = vmul.f32 %v359, 0.25
        %v367 = vmul.f32 %v360, 0.25
        %v368 = vmul.f32 %v361, 0.25
        %v369 = vadd.f32 %v365, 1e-08
        %v370 = vadd.f32 %v366, 1e-08
        %v371 = vadd.f32 %v367, 1e-08
        %v372 = vadd.f32 %v368, 1e-08
        %v374 = vrot.slane %v213, 1
        %v375 = vrot.slane %v213, 2
        %v376 = vrot.slane %v213, 3
        %v377 = vperm.slane %v213, 0
        %v378 = vperm.slane %v374, 0
        %v379 = vperm.slane %v375, 0
        %v380 = vperm.slane %v376, 0
        %381 = vset.pattern.permute.xlu0 0
        %382 = vperm.xlu0 %381, %v377
        %v383 = vpop.permute.xlu0 %382
        %385 = vset.pattern.permute.xlu0 0
        %386 = vperm.xlu0 %385, %v378
        %v387 = vpop.permute.xlu0 %386
        %389 = vset.pattern.permute.xlu0 0
        %390 = vperm.xlu0 %389, %v379
        %v391 = vpop.permute.xlu0 %390
        %393 = vset.pattern.permute.xlu0 0
        %394 = vperm.xlu0 %393, %v380
        %v395 = vpop.permute.xlu0 %394
        %v397 = vrcp.pop %v369
        %v398 = vmul.f32 %v369, %v397
        %v399 = vsub.f32 1.0, %v398
        %v400 = vmul.f32 %v397, %v399
        %v401 = vadd.f32 %v397, %v400
        %vm402 = vweird.f32 %v369
        %vm403 = vweird.f32 %v397
        %vm404 = vmor %vm402, %vm403
        %v405 = vsel %vm404, %v397, %v401
        %v406 = vand.u32 2147483647, %v369
        %vm407 = vcmp.eq.f32.partialorder %v406, 8.507059e+37
        %v408 = vand.u32 %v369, 2147483648
        %v409 = vor.u32 1.1754944e-38, %v408
        %v410 = vsel %vm407, %v409, %v405
        %v411 = vmul.f32 %v383, %v410
        %v412 = vrcp.pop %v370
        %v413 = vmul.f32 %v370, %v412
        %v414 = vsub.f32 1.0, %v413
        %v415 = vmul.f32 %v412, %v414
        %v416 = vadd.f32 %v412, %v415
        %vm417 = vweird.f32 %v370
        %vm418 = vweird.f32 %v412
        %vm419 = vmor %vm417, %vm418
        %v420 = vsel %vm419, %v412, %v416
        %v421 = vand.u32 2147483647, %v370
        %vm422 = vcmp.eq.f32.partialorder %v421, 8.507059e+37
        %v423 = vand.u32 %v370, 2147483648
        %v424 = vor.u32 1.1754944e-38, %v423
        %v425 = vsel %vm422, %v424, %v420
        %v426 = vmul.f32 %v387, %v425
        %v427 = vrcp.pop %v371
        %v428 = vmul.f32 %v371, %v427
        %v429 = vsub.f32 1.0, %v428
        %v430 = vmul.f32 %v427, %v429
        %v431 = vadd.f32 %v427, %v430
        %vm432 = vweird.f32 %v371
        %vm433 = vweird.f32 %v427
        %vm434 = vmor %vm432, %vm433
        %v435 = vsel %vm434, %v427, %v431
        %v436 = vand.u32 2147483647, %v371
        %vm437 = vcmp.eq.f32.partialorder %v436, 8.507059e+37
        %v438 = vand.u32 %v371, 2147483648
        %v439 = vor.u32 1.1754944e-38, %v438
        %v440 = vsel %vm437, %v439, %v435
        %v441 = vmul.f32 %v391, %v440
        %v442 = vrcp.pop %v372
        %v443 = vmul.f32 %v372, %v442
        %v444 = vsub.f32 1.0, %v443
        %v445 = vmul.f32 %v442, %v444
        %v446 = vadd.f32 %v442, %v445
        %vm447 = vweird.f32 %v372
        %vm448 = vweird.f32 %v442
        %vm449 = vmor %vm447, %vm448
        %v450 = vsel %vm449, %v442, %v446
        %v451 = vand.u32 2147483647, %v372
        %vm452 = vcmp.eq.f32.partialorder %v451, 8.507059e+37
        %v453 = vand.u32 %v372, 2147483648
        %v454 = vor.u32 1.1754944e-38, %v453
        %v455 = vsel %vm452, %v454, %v450
        %v456 = vmul.f32 %v395, %v455
        %461 = vst [vmem:[#allocation1] ss:$4 sm:$0xff] %v411
        %s462 = scalar_lea.vmem [#allocation1], 1
        %463 = vst [vmem:[%s462] ss:$4 sm:$0xff] %v426
        %s464 = scalar_lea.vmem [#allocation1], 2
        %465 = vst [vmem:[%s464] ss:$4 sm:$0xff] %v441
        %s466 = scalar_lea.vmem [#allocation1], 3
        %467 = vst [vmem:[%s466] ss:$4 sm:$0xff] %v456
        %v468 = vld.sshfl [vmem:[#allocation1] sm:$0xff pattern:$0x73625140]
        %vm469 = vcmask 64512
        %v470 = vsel %vm469, %v468, 0
        %472 = vmatpush.msra.mxu0 0.0
        %473 = vmatpush.msra.mxu0 0.0
        %474 = vmatpush.msra.mxu0 0.0
        %475 = vmatpush.msra.mxu0 0.0
        %476 = vmatpush.msra.mxu0 0.0
        %477 = vmatpush.msra.mxu0 0.0
        %478 = vmatpush.msra.mxu0 0.0
        %479 = vmatpush.msra.mxu0 0.0
        %480 = vmatpush.msra.mxu0 0.0
        %481 = vmatpush.msra.mxu0 0.0
        %482 = vmatpush.msra.mxu0 0.0
        %483 = vmatpush.msra.mxu0 0.0
        %484 = vmatpush.msra.mxu0 0.0
        %485 = vmatpush.msra.mxu0 0.0
        %486 = vmatpush.msra.mxu0 0.0
        %487 = vmatpush.msra.mxu0 %v312
        %488 = vmatmul.f32.gmra.mxu0 %v470
        %v489 = vpop.f32.mrf.mxu0
        %v490 = vadd.f32 0.0, %v489
        %491 = vdwg.mxu0
        %v493 = vrot.slane %v490, 2
        %v494 = vrot.slane %v490, 4
        %v495 = vrot.slane %v490, 6
        %v499 = vmul.f32 %v214, %v490
        %v500 = vmul.f32 %v215, %v493
        %v501 = vmul.f32 %v216, %v494
        %v502 = vmul.f32 %v217, %v495
        %503 = vst [vmem:[%s206] sm:$0x3] %v499
        %504 = vst [vmem:[%s206 + $0x2] sm:$0x3] %v500
        %505 = vst [vmem:[%s206 + $0x4] sm:$0x3] %v501
        %506 = vst [vmem:[%s206 + $0x6] sm:$0x3] %v502
        %s507 = sand.u32 %s106, 1
        %s508 = scalar_lea.sflag [#allocation4], %s507
        %s509 = sand.u32 %s106, 1
        %s510 = smul.addr %s509, 8
        %s511 = scalar_lea.vmem [#allocation5], %s510
        // Predicated region
        $region33: #{tpu_custom_call.1} parent=27 // pred_check
          %p512 = pneg %p116
        $region34: #{tpu_custom_call.1} parent=27 // pred_check_branch
          %514 = sbr.rel (%p512) target = $region36
        $region35: #{tpu_custom_call.1} parent=27 // pred_region
          %s515 = smul.u32 4, %s25
          %517 = vsyncadd %s508, 0
          %s518 = sadd.s32 %s26, %s515
          %s519 = smul.addr %s24, 4
          %s520 = sadd.s32 %s518, %s519
          %s521 = smul.addr %s520, 2
          %s522 = scalar_lea.hbm %s2, %s521
          %s523 = sshll.u32 %s511, 4
          %s524 = int_to_ptr.vmem [resolvable:$true] %s523
          %s525 = sshll.u32 %s522, 4
          %s526 = int_to_ptr.hbm [resolvable:$true] %s525
          %531 = dma.vmem_to_hbm [thread:$0]  %s524, 128, %s526, %s508, 32, 32, 2
        $region36: #{tpu_custom_call.1} parent=27 // pred_fallthru
          _
      $region28: #{tpu_custom_call.1} parent=5 // pred_fallthru
        _
      %p532 = scmp.le.s32.totalorder 2, %s14
      // Predicated region
      $region37: #{tpu_custom_call.1} parent=5 // pred_check
        %p533 = pneg %p532
      $region38: #{tpu_custom_call.1} parent=5 // pred_check_branch
        %535 = sbr.rel (%p533) target = $region40
      $region39: #{tpu_custom_call.1} parent=5 // pred_region
        %s536 = ssub.s32 %s14, 2
        // Predicated region
        $region41: #{tpu_custom_call.1} parent=39 // pred_check
          %p537 = pneg %p122
        $region42: #{tpu_custom_call.1} parent=39 // pred_check_branch
          %539 = sbr.rel (%p537) target = $region44
        $region43: #{tpu_custom_call.1} parent=39 // pred_region
          %s540 = sand.u32 %s107, 1
          %s541 = scalar_lea.sflag [#allocation4], %s540
          %s542 = sand.u32 %s107, 1
          %s543 = smul.addr %s542, 8
          %s544 = scalar_lea.vmem [#allocation5], %s543
          %546 = dma.done %s541, 128
        $region44: #{tpu_custom_call.1} parent=39 // pred_fallthru
          _
      $region40: #{tpu_custom_call.1} parent=5 // pred_fallthru
        _
    $region6: #{tpu_custom_call.1} parent=1 // loop_footer
      %s18 = sadd.s32 1, %s14
    $region7: #{tpu_custom_call.1} parent=1 // loop_footer_branch
      %13 = sbr.rel target = $region3
    $region8: #{tpu_custom_call.1} parent=1 // loop_exit
      _
    %547 = vsyncpa [#allocation3], 1
    %s548 = scalar_lea.sflag [#allocation3], 1
    %549 = vsyncpa %s548, 1
    %550 = vsyncpa [#allocation4], 1
    %s551 = scalar_lea.sflag [#allocation4], 1
    %552 = vsyncpa %s551, 1

</llo_original>
